<compile_context>
chip_gen: v6e
topology: v6e:2x2x1
jax: 0.10.0
libtpu: 0.0.40
codegen_flags: <defaults>
</compile_context>

<pallas_src>
import functools

import jax
import jax.numpy as jnp
from jax import lax
from jax.experimental import pallas as pl
from jax.experimental.pallas import tpu as pltpu


def _round_up(a, b):
    return (a + b - 1) // b * b


def _sublane_multiple(dtype):
    # (8,128) tile for 32-bit, (16,128) for bf16, (32,128) for int8/fp8.
    return max(8, 32 // jnp.dtype(dtype).itemsize)


def _pick_hidden_chunk(h, target=512):
    """A divisor of H (multiple of 128 when possible) used as the in-kernel
    hidden-chunk width."""
    if h <= target:
        return h
    for cand in (512, 1024, 768, 640, 384, 256, 128):
        if cand <= h and h % cand == 0:
            return cand
    return h


def _vmem_limit_bytes():
    """Generation-aware VMEM limit: ~80% of physical capacity (leaves headroom
    for compiler scratch / pipeline buffers), capped at 112 MiB."""
    try:
        cap = pltpu.get_tpu_info().vmem_capacity_bytes
    except Exception:
        cap = 64 * 1024 * 1024  # conservative (v7x per-TC) fallback
    return min(int(cap * 0.8), 112 * 1024 * 1024)


def _mlp_kernel(x_ref, w_fc_ref, b_fc_ref, w_proj_ref, b_proj_ref, o_ref,
                acc_ref, *, th, n_chunks, unroll):
    """One grid step == one (tm, C) row tile of the flattened (B*T, C) input.

    Loops over H in th-wide chunks:
        h_k = gelu_tanh(x @ W_fc[:, k] + b_fc[k])         (f32)
        acc += h_k @ W_proj[k, :]                         (f32 accumulate)
    and finally writes acc + b_proj as a lane-dense (tm, C) slab.
    """
    acc_ref[...] = jnp.zeros_like(acc_ref)

    c0 = jnp.float32(0.7978845608028654)  # sqrt(2/pi)
    c1 = jnp.float32(0.044715)

    def chunk(k, carry):
        off = pl.multiple_of(k * th, th)
        w1 = w_fc_ref[:, pl.ds(off, th)]                       # (C, th)
        # c_fc chunk: (tm, C) @ (C, th) -> (tm, th), f32 accumulation.
        h = jnp.dot(x_ref[...], w1, preferred_element_type=jnp.float32)
        h = h + b_fc_ref[:, pl.ds(off, th)]                    # bias kept in f32
        # GELU, tanh approximation (matches nn.GELU(approximate='tanh')).
        h = 0.5 * h * (1.0 + jnp.tanh(c0 * (h + c1 * h * h * h)))
        # c_proj chunk: (tm, th) @ (th, C) accumulated into the f32 scratch.
        w2 = w_proj_ref[pl.ds(off, th), :]                     # (th, C)
        acc_ref[...] += jnp.dot(h.astype(w2.dtype), w2,
                                preferred_element_type=jnp.float32)
        return carry

    lax.fori_loop(0, n_chunks, chunk, 0, unroll=unroll)

    o_ref[...] = (acc_ref[...] + b_proj_ref[...]).astype(o_ref.dtype)


def prepare_mlp_params(w_fc, b_fc, w_proj, b_proj, *, compute_dtype=None):
    """One-time parameter preprocessing (hoisted out of the forward pass).

    w_fc:   (H, C) torch nn.Linear layout, H = 4*C
    b_fc:   (H,)
    w_proj: (C, H)
    b_proj: (C,)
    Returns pre-transposed (in, out) weights in the compute dtype and f32
    biases reshaped to (1, H)/(1, C).
    """
    H, C = w_fc.shape
    assert w_proj.shape == (C, H) and b_fc.shape == (H,) and b_proj.shape == (C,)
    cd = jnp.dtype(compute_dtype) if compute_dtype is not None else jnp.dtype(w_fc.dtype)
    w_fc_t = jnp.transpose(w_fc).astype(cd)         # (C, H)
    w_proj_t = jnp.transpose(w_proj).astype(cd)     # (H, C)
    b_fc_2d = b_fc.reshape(1, H).astype(jnp.float32)
    b_proj_2d = b_proj.reshape(1, C).astype(jnp.float32)
    return w_fc_t, b_fc_2d, w_proj_t, b_proj_2d


def mlp_forward(x, params, *, block_m=256, hidden_chunk=512):
    """GPT-2 MLP forward.  x: (B, T, C); params from prepare_mlp_params."""
    w_fc_t, b_fc_2d, w_proj_t, b_proj_2d = params
    B, T, C = x.shape
    H = w_fc_t.shape[1]
    assert w_fc_t.shape == (C, H) and w_proj_t.shape == (H, C)
    assert b_fc_2d.shape == (1, H) and b_proj_2d.shape == (1, C)

    compute_dtype = w_fc_t.dtype
    out_dtype = x.dtype

    # Flatten batch*sequence into one row axis and tile it (dtype-aware sublane).
    M = B * T
    sub = _sublane_multiple(compute_dtype)
    tm = _round_up(min(block_m, _round_up(M, sub)), sub)
    Mp = _round_up(M, tm)

    x2 = x.reshape(M, C).astype(compute_dtype)
    if Mp != M:
        x2 = jnp.pad(x2, ((0, Mp - M), (0, 0)))

    # Hidden-dimension chunking inside the kernel.
    th = _pick_hidden_chunk(H, hidden_chunk)
    n_chunks = H // th
    unroll = n_chunks <= 8

    kernel = functools.partial(_mlp_kernel, th=th, n_chunks=n_chunks,
                               unroll=unroll)

    cd_size = jnp.dtype(compute_dtype).itemsize
    cost = pl.CostEstimate(
        flops=4 * Mp * C * H,                       # two matmuls, 2*M*K*N each
        transcendentals=Mp * H,                     # one tanh per hidden act
        bytes_accessed=(Mp * C * (cd_size + jnp.dtype(out_dtype).itemsize)
                        + 2 * C * H * cd_size + (H + C) * 4),
    )

    def build(weight_pipeline_mode):
        def resident_spec(shape):
            kwargs = {}
            if weight_pipeline_mode is not None:
                kwargs["pipeline_mode"] = weight_pipeline_mode
            return pl.BlockSpec(shape, lambda i: (0, 0), **kwargs)

        return pl.pallas_call(
            kernel,
            out_shape=jax.ShapeDtypeStruct((Mp, C), out_dtype),
            grid_spec=pltpu.PrefetchScalarGridSpec(
                num_scalar_prefetch=0,
                grid=(Mp // tm,),
                in_specs=[
                    pl.BlockSpec((tm, C), lambda i: (i, 0)),   # x row tile (pipelined)
                    resident_spec((C, H)),                     # W_fc^T (resident)
                    resident_spec((1, H)),                     # b_fc   (f32)
                    resident_spec((H, C)),                     # W_proj^T (resident)
                    resident_spec((1, C)),                     # b_proj (f32)
                ],
                out_specs=pl.BlockSpec((tm, C), lambda i: (i, 0)),
                scratch_shapes=[pltpu.VMEM((tm, C), jnp.float32)],
            ),
            compiler_params=pltpu.CompilerParams(
                dimension_semantics=("parallel",),   # shard row tiles over v7x's 2 TCs
                vmem_limit_bytes=_vmem_limit_bytes(),
            ),
            cost_estimate=cost,
        )

    args = (x2, w_fc_t, b_fc_2d, w_proj_t, b_proj_2d)
    try:
        # Single-buffer the resident weights/biases (constant index_map ->
        # never re-fetched); halves their VMEM footprint.
        out = build(pl.Buffered(1))(*args)
    except Exception:
        # Fallback for Pallas versions that reject single-buffered specs.
        out = build(None)(*args)

    return out[:M].reshape(B, T, C)


def _reference(x, w_fc, b_fc, w_proj, b_proj):
    """Pure-JAX reference matching the PyTorch MLP (GELU tanh approx)."""
    h = jnp.einsum('btc,hc->bth', x, w_fc) + b_fc
    c0 = 0.7978845608028654
    h = 0.5 * h * (1.0 + jnp.tanh(c0 * (h + 0.044715 * h ** 3)))
    return jnp.einsum('bth,ch->btc', h, w_proj) + b_proj


if __name__ == "__main__":
    # Small config consistent with the module: hidden = 4 * n_embd.
    B, T, C = 2, 8, 32
    H = 4 * C

    key = jax.random.PRNGKey(0)
    kx, k1, k2, k3, k4 = jax.random.split(key, 5)

    x = jax.random.normal(kx, (B, T, C), dtype=jnp.float32)

    # Deterministic parameter init (torch.nn.Linear-style uniform bounds).
    lim_fc = 1.0 / (C ** 0.5)
    lim_proj = 1.0 / (H ** 0.5)
    w_fc = jax.random.uniform(k1, (H, C), jnp.float32, -lim_fc, lim_fc)
    b_fc = jax.random.uniform(k2, (H,), jnp.float32, -lim_fc, lim_fc)
    w_proj = jax.random.uniform(k3, (C, H), jnp.float32, -lim_proj, lim_proj)
    b_proj = jax.random.uniform(k4, (C,), jnp.float32, -lim_proj, lim_proj)

    ref = _reference(x, w_fc, b_fc, w_proj, b_proj)

    # f32 compute path (bit-faithful to the f32 PyTorch module).
    params_f32 = prepare_mlp_params(w_fc, b_fc, w_proj, b_proj)
    out = jax.block_until_ready(mlp_forward(x, params_f32))
    assert out.shape == (B, T, C)
    assert jnp.allclose(out, ref, atol=1e-4, rtol=1e-4), "f32 mismatch vs reference"

    # bf16-MXU compute path (recommended for perf on v5e/v6e/v7x; f32 accumulate,
    # f32 biases).  Looser tolerance due to bf16 rounding of x / weights.
    params_bf16 = prepare_mlp_params(w_fc, b_fc, w_proj, b_proj,
                                     compute_dtype=jnp.bfloat16)
    out_bf16 = jax.block_until_ready(mlp_forward(x, params_bf16))
    assert jnp.allclose(out_bf16.astype(jnp.float32), ref,
                        atol=5e-2, rtol=5e-2), "bf16 mismatch vs reference"

    print("KERNEL_OK")
</pallas_src>

<mosaic_0001>
module attributes {stable_mosaic.version = 11 : i64} {
  func.func @_mlp_kernel(%arg0: i32, %arg1: memref<16x32xf32, #tpu.memory_space<vmem>>, %arg2: memref<32x128xf32, #tpu.memory_space<vmem>>, %arg3: memref<1x128xf32, #tpu.memory_space<vmem>>, %arg4: memref<128x32xf32, #tpu.memory_space<vmem>>, %arg5: memref<1x32xf32, #tpu.memory_space<vmem>>, %arg6: memref<16x32xf32, #tpu.memory_space<vmem>>, %arg7: memref<16x32xf32, #tpu.memory_space<vmem>>) attributes {dimension_semantics = [#tpu.dimension_semantics<parallel>], iteration_bounds = array<i64: 1>, scalar_prefetch = 0 : i64, scratch_operands = 1 : i64, tpu.core_type = #tpu.core_type<tc>, window_params = [{transform_indices = @transform_0, window_bounds = array<i64: 16, 32>}, {pipeline_mode = #tpu.pipeline_mode<synchronous>, transform_indices = @transform_1, window_bounds = array<i64: 32, 128>}, {pipeline_mode = #tpu.pipeline_mode<synchronous>, transform_indices = @transform_2, window_bounds = array<i64: 1, 128>}, {pipeline_mode = #tpu.pipeline_mode<synchronous>, transform_indices = @transform_3, window_bounds = array<i64: 128, 32>}, {pipeline_mode = #tpu.pipeline_mode<synchronous>, transform_indices = @transform_4, window_bounds = array<i64: 1, 32>}, {transform_indices = @transform_5, window_bounds = array<i64: 16, 32>}]} {
    %cst = arith.constant 0.000000e+00 : f32
    %0 = vector.broadcast %cst : f32 to vector<16x32xf32>
    %c0 = arith.constant 0 : index
    %c0_0 = arith.constant 0 : index
    %1 = vector.load %arg7[%c0, %c0_0] : memref<16x32xf32, #tpu.memory_space<vmem>>, vector<16x32xf32>
    tpu.vector_store %arg7[%c0, %c0_0], %0 {strides = array<i32>} : memref<16x32xf32, #tpu.memory_space<vmem>>, vector<16x32xf32>,
    %cst_1 = arith.constant 4.471500e-02 : f32
    %cst_2 = arith.constant 0.797884583 : f32
    %c0_i32 = arith.constant 0 : i32
    %c128_i32 = arith.constant 128 : i32
    %2 = arith.muli %c0_i32, %c128_i32 : i32
    %3 = tpu.assume_multiple %2, 128 : i32
    %c0_3 = arith.constant 0 : index
    %4 = arith.index_cast %3 : i32 to index
    %5 = vector.load %arg2[%c0_3, %4] : memref<32x128xf32, #tpu.memory_space<vmem>>, vector<32x128xf32>
    %c0_4 = arith.constant 0 : index
    %c0_5 = arith.constant 0 : index
    %6 = vector.load %arg1[%c0_4, %c0_5] : memref<16x32xf32, #tpu.memory_space<vmem>>, vector<16x32xf32>
    %cst_6 = arith.constant dense<0.000000e+00> : vector<16x128xf32>
    %7 = tpu.matmul %6, %5, %cst_6 {dimension_numbers = #tpu.dot_dimension_numbers<[1], [0], [0], [1], [0, 0, 1, 1], [], []>} : vector<16x32xf32>, vector<32x128xf32>, vector<16x128xf32> -> vector<16x128xf32>
    %c0_7 = arith.constant 0 : index
    %8 = arith.index_cast %3 : i32 to index
    %9 = vector.load %arg3[%c0_7, %8] : memref<1x128xf32, #tpu.memory_space<vmem>>, vector<1x128xf32>
    %10 = vector.broadcast %9 : vector<1x128xf32> to vector<16x128xf32>
    %11 = arith.addf %7, %10 : vector<16x128xf32>
    %cst_8 = arith.constant 5.000000e-01 : f32
    %12 = vector.broadcast %cst_8 : f32 to vector<16x128xf32>
    %13 = arith.mulf %12, %11 : vector<16x128xf32>
    %14 = vector.broadcast %cst_1 : f32 to vector<16x128xf32>
    %15 = arith.mulf %14, %11 : vector<16x128xf32>
    %16 = arith.mulf %15, %11 : vector<16x128xf32>
    %17 = arith.mulf %16, %11 : vector<16x128xf32>
    %18 = arith.addf %11, %17 : vector<16x128xf32>
    %19 = vector.broadcast %cst_2 : f32 to vector<16x128xf32>
    %20 = arith.mulf %19, %18 : vector<16x128xf32>
    %21 = math.tanh %20 : vector<16x128xf32>
    %cst_9 = arith.constant 1.000000e+00 : f32
    %22 = vector.broadcast %cst_9 : f32 to vector<16x128xf32>
    %23 = arith.addf %22, %21 : vector<16x128xf32>
    %24 = arith.mulf %13, %23 : vector<16x128xf32>
    %25 = arith.index_cast %3 : i32 to index
    %c0_10 = arith.constant 0 : index
    %26 = vector.load %arg4[%25, %c0_10] : memref<128x32xf32, #tpu.memory_space<vmem>>, vector<128x32xf32>
    %c0_11 = arith.constant 0 : index
    %c0_12 = arith.constant 0 : index
    %27 = vector.load %arg7[%c0_11, %c0_12] : memref<16x32xf32, #tpu.memory_space<vmem>>, vector<16x32xf32>
    %cst_13 = arith.constant dense<0.000000e+00> : vector<16x32xf32>
    %28 = tpu.matmul %24, %26, %cst_13 {dimension_numbers = #tpu.dot_dimension_numbers<[1], [0], [0], [1], [0, 0, 1, 1], [], []>} : vector<16x128xf32>, vector<128x32xf32>, vector<16x32xf32> -> vector<16x32xf32>
    %29 = arith.addf %27, %28 : vector<16x32xf32>
    %c0_14 = arith.constant 0 : index
    %c0_15 = arith.constant 0 : index
    %30 = vector.load %arg7[%c0_14, %c0_15] : memref<16x32xf32, #tpu.memory_space<vmem>>, vector<16x32xf32>
    tpu.vector_store %arg7[%c0_14, %c0_15], %29 {strides = array<i32>} : memref<16x32xf32, #tpu.memory_space<vmem>>, vector<16x32xf32>,
    %c1_i32 = arith.constant 1 : i32
    %c0_16 = arith.constant 0 : index
    %c0_17 = arith.constant 0 : index
    %31 = vector.load %arg7[%c0_16, %c0_17] : memref<16x32xf32, #tpu.memory_space<vmem>>, vector<16x32xf32>
    %c0_18 = arith.constant 0 : index
    %c0_19 = arith.constant 0 : index
    %32 = vector.load %arg5[%c0_18, %c0_19] : memref<1x32xf32, #tpu.memory_space<vmem>>, vector<1x32xf32>
    %33 = vector.broadcast %32 : vector<1x32xf32> to vector<16x32xf32>
    %34 = arith.addf %31, %33 : vector<16x32xf32>
    %c0_20 = arith.constant 0 : index
    %c0_21 = arith.constant 0 : index
    %35 = vector.load %arg6[%c0_20, %c0_21] : memref<16x32xf32, #tpu.memory_space<vmem>>, vector<16x32xf32>
    tpu.vector_store %arg6[%c0_20, %c0_21], %34 {strides = array<i32>} : memref<16x32xf32, #tpu.memory_space<vmem>>, vector<16x32xf32>,
    return
  }
  func.func @transform_0(%arg0: i32) -> (i32, i32) {
    %c0_i32 = arith.constant 0 : i32
    %c0_i32_0 = arith.constant 0 : i32
    return %arg0, %c0_i32 : i32, i32
  }
  func.func @transform_1(%arg0: i32) -> (i32, i32) {
    %c0_i32 = arith.constant 0 : i32
    %c0_i32_0 = arith.constant 0 : i32
    %c0_i32_1 = arith.constant 0 : i32
    return %c0_i32, %c0_i32_0 : i32, i32
  }
  func.func @transform_2(%arg0: i32) -> (i32, i32) {
    %c0_i32 = arith.constant 0 : i32
    %c0_i32_0 = arith.constant 0 : i32
    %c0_i32_1 = arith.constant 0 : i32
    return %c0_i32, %c0_i32_0 : i32, i32
  }
  func.func @transform_3(%arg0: i32) -> (i32, i32) {
    %c0_i32 = arith.constant 0 : i32
    %c0_i32_0 = arith.constant 0 : i32
    %c0_i32_1 = arith.constant 0 : i32
    return %c0_i32, %c0_i32_0 : i32, i32
  }
  func.func @transform_4(%arg0: i32) -> (i32, i32) {
    %c0_i32 = arith.constant 0 : i32
    %c0_i32_0 = arith.constant 0 : i32
    %c0_i32_1 = arith.constant 0 : i32
    return %c0_i32, %c0_i32_0 : i32, i32
  }
  func.func @transform_5(%arg0: i32) -> (i32, i32) {
    %c0_i32 = arith.constant 0 : i32
    %c0_i32_0 = arith.constant 0 : i32
    return %arg0, %c0_i32 : i32, i32
  }
}

module attributes {stable_mosaic.version = 11 : i64} {
  func.func @_mlp_kernel(%arg0: i32, %arg1: memref<16x32xf32, #tpu.memory_space<vmem>>, %arg2: memref<32x128xf32, #tpu.memory_space<vmem>>, %arg3: memref<1x128xf32, #tpu.memory_space<vmem>>, %arg4: memref<128x32xf32, #tpu.memory_space<vmem>>, %arg5: memref<1x32xf32, #tpu.memory_space<vmem>>, %arg6: memref<16x32xf32, #tpu.memory_space<vmem>>, %arg7: memref<16x32xf32, #tpu.memory_space<vmem>>) attributes {dimension_semantics = [#tpu.dimension_semantics<parallel>], iteration_bounds = array<i64: 1>, scalar_prefetch = 0 : i64, scratch_operands = 1 : i64, tpu.core_type = #tpu.core_type<tc>, window_params = [{transform_indices = @transform_0, window_bounds = array<i64: 16, 32>}, {pipeline_mode = #tpu.pipeline_mode<synchronous>, transform_indices = @transform_1, window_bounds = array<i64: 32, 128>}, {pipeline_mode = #tpu.pipeline_mode<synchronous>, transform_indices = @transform_2, window_bounds = array<i64: 1, 128>}, {pipeline_mode = #tpu.pipeline_mode<synchronous>, transform_indices = @transform_3, window_bounds = array<i64: 128, 32>}, {pipeline_mode = #tpu.pipeline_mode<synchronous>, transform_indices = @transform_4, window_bounds = array<i64: 1, 32>}, {transform_indices = @transform_5, window_bounds = array<i64: 16, 32>}]} {
    %cst = arith.constant 0.000000e+00 : f32
    %0 = vector.broadcast %cst : f32 to vector<16x32xf32>
    %c0 = arith.constant 0 : index
    %c0_0 = arith.constant 0 : index
    %1 = vector.load %arg7[%c0, %c0_0] : memref<16x32xf32, #tpu.memory_space<vmem>>, vector<16x32xf32>
    tpu.vector_store %arg7[%c0, %c0_0], %0 {strides = array<i32>} : memref<16x32xf32, #tpu.memory_space<vmem>>, vector<16x32xf32>,
    %cst_1 = arith.constant 4.471500e-02 : f32
    %cst_2 = arith.constant 0.797884583 : f32
    %c0_i32 = arith.constant 0 : i32
    %c128_i32 = arith.constant 128 : i32
    %2 = arith.muli %c0_i32, %c128_i32 : i32
    %3 = tpu.assume_multiple %2, 128 : i32
    %c0_3 = arith.constant 0 : index
    %4 = arith.index_cast %3 : i32 to index
    %5 = vector.load %arg2[%c0_3, %4] : memref<32x128xf32, #tpu.memory_space<vmem>>, vector<32x128xf32>
    %c0_4 = arith.constant 0 : index
    %c0_5 = arith.constant 0 : index
    %6 = vector.load %arg1[%c0_4, %c0_5] : memref<16x32xf32, #tpu.memory_space<vmem>>, vector<16x32xf32>
    %cst_6 = arith.constant dense<0.000000e+00> : vector<16x128xf32>
    %7 = tpu.matmul %6, %5, %cst_6 {dimension_numbers = #tpu.dot_dimension_numbers<[1], [0], [0], [1], [0, 0, 1, 1], [], []>} : vector<16x32xf32>, vector<32x128xf32>, vector<16x128xf32> -> vector<16x128xf32>
    %c0_7 = arith.constant 0 : index
    %8 = arith.index_cast %3 : i32 to index
    %9 = vector.load %arg3[%c0_7, %8] : memref<1x128xf32, #tpu.memory_space<vmem>>, vector<1x128xf32>
    %10 = vector.broadcast %9 : vector<1x128xf32> to vector<16x128xf32>
    %11 = arith.addf %7, %10 : vector<16x128xf32>
    %cst_8 = arith.constant 5.000000e-01 : f32
    %12 = vector.broadcast %cst_8 : f32 to vector<16x128xf32>
    %13 = arith.mulf %12, %11 : vector<16x128xf32>
    %14 = vector.broadcast %cst_1 : f32 to vector<16x128xf32>
    %15 = arith.mulf %14, %11 : vector<16x128xf32>
    %16 = arith.mulf %15, %11 : vector<16x128xf32>
    %17 = arith.mulf %16, %11 : vector<16x128xf32>
    %18 = arith.addf %11, %17 : vector<16x128xf32>
    %19 = vector.broadcast %cst_2 : f32 to vector<16x128xf32>
    %20 = arith.mulf %19, %18 : vector<16x128xf32>
    %21 = math.tanh %20 : vector<16x128xf32>
    %cst_9 = arith.constant 1.000000e+00 : f32
    %22 = vector.broadcast %cst_9 : f32 to vector<16x128xf32>
    %23 = arith.addf %22, %21 : vector<16x128xf32>
    %24 = arith.mulf %13, %23 : vector<16x128xf32>
    %25 = arith.index_cast %3 : i32 to index
    %c0_10 = arith.constant 0 : index
    %26 = vector.load %arg4[%25, %c0_10] : memref<128x32xf32, #tpu.memory_space<vmem>>, vector<128x32xf32>
    %c0_11 = arith.constant 0 : index
    %c0_12 = arith.constant 0 : index
    %27 = vector.load %arg7[%c0_11, %c0_12] : memref<16x32xf32, #tpu.memory_space<vmem>>, vector<16x32xf32>
    %cst_13 = arith.constant dense<0.000000e+00> : vector<16x32xf32>
    %28 = tpu.matmul %24, %26, %cst_13 {dimension_numbers = #tpu.dot_dimension_numbers<[1], [0], [0], [1], [0, 0, 1, 1], [], []>} : vector<16x128xf32>, vector<128x32xf32>, vector<16x32xf32> -> vector<16x32xf32>
    %29 = arith.addf %27, %28 : vector<16x32xf32>
    %c0_14 = arith.constant 0 : index
    %c0_15 = arith.constant 0 : index
    %30 = vector.load %arg7[%c0_14, %c0_15] : memref<16x32xf32, #tpu.memory_space<vmem>>, vector<16x32xf32>
    tpu.vector_store %arg7[%c0_14, %c0_15], %29 {strides = array<i32>} : memref<16x32xf32, #tpu.memory_space<vmem>>, vector<16x32xf32>,
    %c1_i32 = arith.constant 1 : i32
    %c0_16 = arith.constant 0 : index
    %c0_17 = arith.constant 0 : index
    %31 = vector.load %arg7[%c0_16, %c0_17] : memref<16x32xf32, #tpu.memory_space<vmem>>, vector<16x32xf32>
    %c0_18 = arith.constant 0 : index
    %c0_19 = arith.constant 0 : index
    %32 = vector.load %arg5[%c0_18, %c0_19] : memref<1x32xf32, #tpu.memory_space<vmem>>, vector<1x32xf32>
    %33 = vector.broadcast %32 : vector<1x32xf32> to vector<16x32xf32>
    %34 = arith.addf %31, %33 : vector<16x32xf32>
    %c0_20 = arith.constant 0 : index
    %c0_21 = arith.constant 0 : index
    %35 = vector.load %arg6[%c0_20, %c0_21] : memref<16x32xf32, #tpu.memory_space<vmem>>, vector<16x32xf32>
    tpu.vector_store %arg6[%c0_20, %c0_21], %34 {strides = array<i32>} : memref<16x32xf32, #tpu.memory_space<vmem>>, vector<16x32xf32>,
    return
  }
  func.func @transform_0(%arg0: i32) -> (i32, i32) {
    %c0_i32 = arith.constant 0 : i32
    %c0_i32_0 = arith.constant 0 : i32
    return %arg0, %c0_i32 : i32, i32
  }
  func.func @transform_1(%arg0: i32) -> (i32, i32) {
    %c0_i32 = arith.constant 0 : i32
    %c0_i32_0 = arith.constant 0 : i32
    %c0_i32_1 = arith.constant 0 : i32
    return %c0_i32, %c0_i32_0 : i32, i32
  }
  func.func @transform_2(%arg0: i32) -> (i32, i32) {
    %c0_i32 = arith.constant 0 : i32
    %c0_i32_0 = arith.constant 0 : i32
    %c0_i32_1 = arith.constant 0 : i32
    return %c0_i32, %c0_i32_0 : i32, i32
  }
  func.func @transform_3(%arg0: i32) -> (i32, i32) {
    %c0_i32 = arith.constant 0 : i32
    %c0_i32_0 = arith.constant 0 : i32
    %c0_i32_1 = arith.constant 0 : i32
    return %c0_i32, %c0_i32_0 : i32, i32
  }
  func.func @transform_4(%arg0: i32) -> (i32, i32) {
    %c0_i32 = arith.constant 0 : i32
    %c0_i32_0 = arith.constant 0 : i32
    %c0_i32_1 = arith.constant 0 : i32
    return %c0_i32, %c0_i32_0 : i32, i32
  }
  func.func @transform_5(%arg0: i32) -> (i32, i32) {
    %c0_i32 = arith.constant 0 : i32
    %c0_i32_0 = arith.constant 0 : i32
    return %arg0, %c0_i32 : i32, i32
  }
}

</mosaic_0001>

<llo_original>
// kernel: tpu_custom_call.1
$region0: #{tpu_custom_call.1}
  #allocation0 [shape = 'u32[]', space=smem, size = 0x4, offset = 0x4, fixed_abs, tag = 'smem constant byte address 0x4 - core index']
  #allocation1 [shape = 'u32[144,128]{1,0:T(1,128)}', space=vmem, size = 0x12000, scoped, tag = 'internal scratch']
  #allocation2 [shape = 'f32[16,32]{1,0:T(8,128)}', space=vmem, size = 0x2000, scoped, tag = 'scratch operand']
  %s0 = inlined_call_operand.vmem [shape: f32[16,32], index: 0, kind: input, shape index: {}]
  %s1 = inlined_call_operand.vmem [shape: f32[32,128], index: 1, kind: input, shape index: {}]
  %s2 = inlined_call_operand.vmem [shape: f32[1,128], index: 2, kind: input, shape index: {}]
  %s3 = inlined_call_operand.vmem [shape: f32[128,32], index: 3, kind: input, shape index: {}]
  %s4 = inlined_call_operand.vmem [shape: f32[1,32], index: 4, kind: input, shape index: {}]
  %s5 = inlined_call_operand.hbm [shape: f32[16,32], index: 5, kind: output, shape index: {}]
  %s6 = sld [smem:[#allocation0]]
  $region30: #{tpu_custom_call.1} parent=0
    _
  %s8 = ssub.s32 1, %s6
  %s9 = scalar_select 0, %s8, %s6
  $region1: #{tpu_custom_call.1} parent=0
    #allocation3 [shape = 'u8[8192]{0}', space=vmem, size = 0x2000, scoped, tag = 'output window, operand 0, single buffered']
    #allocation4 [shape = 's32[1]{0}', space=sflag, size = 0x4, scoped, tag = 'scoped memory for tpu_custom_call.1']
    %10 = vsyncpa [#allocation4], 0
    // Predicated region
    $region2: #{tpu_custom_call.1} parent=1 // pred_check
      _
    $region3: #{tpu_custom_call.1} parent=1 // pred_check_branch
      %12 = sbr.rel (0) target = $region5
    $region4: #{tpu_custom_call.1} parent=1 // pred_region
      _
    $region5: #{tpu_custom_call.1} parent=1 // pred_fallthru
      _
    // Predicated region
    $region6: #{tpu_custom_call.1} parent=1 // pred_check
      _
    $region7: #{tpu_custom_call.1} parent=1 // pred_check_branch
      %14 = sbr.rel (0) target = $region9
    $region8: #{tpu_custom_call.1} parent=1 // pred_region
      _
    $region9: #{tpu_custom_call.1} parent=1 // pred_fallthru
      _
    // Predicated region
    $region10: #{tpu_custom_call.1} parent=1 // pred_check
      _
    $region11: #{tpu_custom_call.1} parent=1 // pred_check_branch
      %16 = sbr.rel (0) target = $region13
    $region12: #{tpu_custom_call.1} parent=1 // pred_region
      _
    $region13: #{tpu_custom_call.1} parent=1 // pred_fallthru
      _
    // Predicated region
    $region14: #{tpu_custom_call.1} parent=1 // pred_check
      _
    $region15: #{tpu_custom_call.1} parent=1 // pred_check_branch
      %18 = sbr.rel (0) target = $region17
    $region16: #{tpu_custom_call.1} parent=1 // pred_region
      _
    $region17: #{tpu_custom_call.1} parent=1 // pred_fallthru
      _
    // Predicated region
    $region18: #{tpu_custom_call.1} parent=1 // pred_check
      _
    $region19: #{tpu_custom_call.1} parent=1 // pred_check_branch
      %20 = sbr.rel (0) target = $region21
    $region20: #{tpu_custom_call.1} parent=1 // pred_region
      _
    $region21: #{tpu_custom_call.1} parent=1 // pred_fallthru
      _
    %vm21 = vcmask 261120
    %22 = vst.msk [vmem:[#allocation2] sm:$0xff] %vm21, 0.0
    %23 = vst.msk [vmem:[#allocation2 + $0x8] sm:$0xff] %vm21, 0.0
    %v24 = vld [vmem:[%s1] sm:$0xff]
    %v25 = vld [vmem:[%s1 + $0x8] sm:$0xff]
    %v26 = vld [vmem:[%s1 + $0x10] sm:$0xff]
    %v27 = vld [vmem:[%s1 + $0x18] sm:$0xff]
    %v28 = vld [vmem:[%s0] sm:$0xff]
    %v29 = vld [vmem:[%s0 + $0x8] sm:$0xff]
    %v30 = vld [vmem:[%s2] sm:$0x1]
    %v32 = vlaneseq
    %v33 = vshrl.u32 %v32, 7
    %v34 = vsub.s32 0, %v33
    %v35 = vrot.slane %v30, %v34
    %v38 = vsel %vm21, %v28, 0
    %v41 = vsel %vm21, %v29, 0
    %43 = vmatprep.subr.mxu0 0.0
    %44 = vmatpush1.msra.mxu0 0.0
    %45 = vmatprep.subr.mxu0 0.0
    %46 = vmatpush1.msra.mxu0 0.0
    %47 = vmatprep.subr.mxu0 0.0
    %48 = vmatpush1.msra.mxu0 0.0
    %49 = vmatprep.subr.mxu0 0.0
    %50 = vmatpush1.msra.mxu0 0.0
    %51 = vmatprep.subr.mxu0 0.0
    %52 = vmatpush1.msra.mxu0 0.0
    %53 = vmatprep.subr.mxu0 0.0
    %54 = vmatpush1.msra.mxu0 0.0
    %55 = vmatprep.subr.mxu0 0.0
    %56 = vmatpush1.msra.mxu0 0.0
    %57 = vmatprep.subr.mxu0 0.0
    %58 = vmatpush1.msra.mxu0 0.0
    %59 = vmatprep.subr.mxu0 0.0
    %60 = vmatpush1.msra.mxu0 0.0
    %61 = vmatprep.subr.mxu0 0.0
    %62 = vmatpush1.msra.mxu0 0.0
    %63 = vmatprep.subr.mxu0 0.0
    %64 = vmatpush1.msra.mxu0 0.0
    %65 = vmatprep.subr.mxu0 0.0
    %66 = vmatpush1.msra.mxu0 0.0
    %67 = vmatprep.subr.mxu0 0.0
    %68 = vmatpush1.msra.mxu0 %v27
    %69 = vmatprep.subr.mxu0 0.0
    %70 = vmatpush1.msra.mxu0 %v26
    %71 = vmatprep.subr.mxu0 0.0
    %72 = vmatpush1.msra.mxu0 %v25
    %73 = vmatprep.subr.mxu0 0.0
    %74 = vmatpush1.msra.mxu0 %v24
    %75 = vmatprep.subr.mxu0 0.0
    %76 = vmatpush2.msra.mxu0 0.0
    %77 = vmatprep.subr.mxu0 0.0
    %78 = vmatpush2.msra.mxu0 0.0
    %79 = vmatprep.subr.mxu0 0.0
    %80 = vmatpush2.msra.mxu0 0.0
    %81 = vmatprep.subr.mxu0 0.0
    %82 = vmatpush2.msra.mxu0 0.0
    %83 = vmatprep.subr.mxu0 0.0
    %84 = vmatpush2.msra.mxu0 0.0
    %85 = vmatprep.subr.mxu0 0.0
    %86 = vmatpush2.msra.mxu0 0.0
    %87 = vmatprep.subr.mxu0 0.0
    %88 = vmatpush2.msra.mxu0 0.0
    %89 = vmatprep.subr.mxu0 0.0
    %90 = vmatpush2.msra.mxu0 0.0
    %91 = vmatprep.subr.mxu0 0.0
    %92 = vmatpush2.msra.mxu0 0.0
    %93 = vmatprep.subr.mxu0 0.0
    %94 = vmatpush2.msra.mxu0 0.0
    %95 = vmatprep.subr.mxu0 0.0
    %96 = vmatpush2.msra.mxu0 0.0
    %97 = vmatprep.subr.mxu0 0.0
    %98 = vmatpush2.msra.mxu0 0.0
    %99 = vmatprep.subr.mxu0 0.0
    %100 = vmatpush2.msra.mxu0 0.0
    %101 = vmatprep.subr.mxu0 0.0
    %102 = vmatpush2.msra.mxu0 0.0
    %103 = vmatprep.subr.mxu0 0.0
    %104 = vmatpush2.msra.mxu0 0.0
    %105 = vmatprep.subr.mxu0 0.0
    %106 = vmatpush2.msra.mxu0 0.0
    %107 = vmatprep.mubr.f32.mxu0 0.0
    %108 = vmatmul.mubr.f32.gmra.mxu0 %v38
    %v109 = vpop.f32.mrf.mxu0
    %v110 = vadd.f32 %v35, %v109
    %v111 = vpop.f32.mrf.mxu0
    %112 = vmatprep.mubr.f32.mxu0 0.0
    %113 = vmatmul.mubr.f32.gmra.mxu0 %v41
    %v114 = vpop.f32.mrf.mxu0
    %v115 = vadd.f32 %v35, %v114
    %v116 = vpop.f32.mrf.mxu0
    %117 = vdwg.mxu0
    %v118 = vmul.f32 %v110, 0.5
    %v119 = vmul.f32 %v115, 0.5
    %v120 = vmul.f32 %v110, 0.044715
    %v121 = vmul.f32 %v115, 0.044715
    %v122 = vmul.f32 %v120, %v110
    %v123 = vmul.f32 %v121, %v115
    %v124 = vmul.f32 %v122, %v110
    %v125 = vmul.f32 %v123, %v115
    %v126 = vadd.f32 %v110, %v124
    %v127 = vadd.f32 %v115, %v125
    %v128 = vmul.f32 %v126, 0.7978846
    %v129 = vmul.f32 %v127, 0.7978846
    %v130 = vtanh.pop %v128
    %v131 = vtanh.pop %v129
    %v132 = vadd.f32 %v130, 1.0
    %v133 = vadd.f32 %v131, 1.0
    %v134 = vmul.f32 %v118, %v132
    %v135 = vmul.f32 %v119, %v133
    %v136 = vld [vmem:[%s3] sm:$0xff]
    %v137 = vld [vmem:[%s3 + $0x8] sm:$0xff]
    %v138 = vld [vmem:[%s3 + $0x10] sm:$0xff]
    %v139 = vld [vmem:[%s3 + $0x18] sm:$0xff]
    %v140 = vld [vmem:[%s3 + $0x20] sm:$0xff]
    %v141 = vld [vmem:[%s3 + $0x28] sm:$0xff]
    %v142 = vld [vmem:[%s3 + $0x30] sm:$0xff]
    %v143 = vld [vmem:[%s3 + $0x38] sm:$0xff]
    %v144 = vld [vmem:[%s3 + $0x40] sm:$0xff]
    %v145 = vld [vmem:[%s3 + $0x48] sm:$0xff]
    %v146 = vld [vmem:[%s3 + $0x50] sm:$0xff]
    %v147 = vld [vmem:[%s3 + $0x58] sm:$0xff]
    %v148 = vld [vmem:[%s3 + $0x60] sm:$0xff]
    %v149 = vld [vmem:[%s3 + $0x68] sm:$0xff]
    %v150 = vld [vmem:[%s3 + $0x70] sm:$0xff]
    %v151 = vld [vmem:[%s3 + $0x78] sm:$0xff]
    %v152 = vld [vmem:[#allocation2] sm:$0xff]
    %v153 = vld [vmem:[#allocation2 + $0x8] sm:$0xff]
    %154 = vmatprep.subr.mxu0 0.0
    %155 = vmatpush1.msra.mxu0 %v151
    %156 = vmatprep.subr.mxu0 0.0
    %157 = vmatpush1.msra.mxu0 %v150
    %158 = vmatprep.subr.mxu0 0.0
    %159 = vmatpush1.msra.mxu0 %v149
    %160 = vmatprep.subr.mxu0 0.0
    %161 = vmatpush1.msra.mxu0 %v148
    %162 = vmatprep.subr.mxu0 0.0
    %163 = vmatpush1.msra.mxu0 %v147
    %164 = vmatprep.subr.mxu0 0.0
    %165 = vmatpush1.msra.mxu0 %v146
    %166 = vmatprep.subr.mxu0 0.0
    %167 = vmatpush1.msra.mxu0 %v145
    %168 = vmatprep.subr.mxu0 0.0
    %169 = vmatpush1.msra.mxu0 %v144
    %170 = vmatprep.subr.mxu0 0.0
    %171 = vmatpush1.msra.mxu0 %v143
    %172 = vmatprep.subr.mxu0 0.0
    %173 = vmatpush1.msra.mxu0 %v142
    %174 = vmatprep.subr.mxu0 0.0
    %175 = vmatpush1.msra.mxu0 %v141
    %176 = vmatprep.subr.mxu0 0.0
    %177 = vmatpush1.msra.mxu0 %v140
    %178 = vmatprep.subr.mxu0 0.0
    %179 = vmatpush1.msra.mxu0 %v139
    %180 = vmatprep.subr.mxu0 0.0
    %181 = vmatpush1.msra.mxu0 %v138
    %182 = vmatprep.subr.mxu0 0.0
    %183 = vmatpush1.msra.mxu0 %v137
    %184 = vmatprep.subr.mxu0 0.0
    %185 = vmatpush1.msra.mxu0 %v136
    %186 = vmatprep.subr.mxu0 0.0
    %187 = vmatpush2.msra.mxu0 0.0
    %188 = vmatprep.subr.mxu0 0.0
    %189 = vmatpush2.msra.mxu0 0.0
    %190 = vmatprep.subr.mxu0 0.0
    %191 = vmatpush2.msra.mxu0 0.0
    %192 = vmatprep.subr.mxu0 0.0
    %193 = vmatpush2.msra.mxu0 0.0
    %194 = vmatprep.subr.mxu0 0.0
    %195 = vmatpush2.msra.mxu0 0.0
    %196 = vmatprep.subr.mxu0 0.0
    %197 = vmatpush2.msra.mxu0 0.0
    %198 = vmatprep.subr.mxu0 0.0
    %199 = vmatpush2.msra.mxu0 0.0
    %200 = vmatprep.subr.mxu0 0.0
    %201 = vmatpush2.msra.mxu0 0.0
    %202 = vmatprep.subr.mxu0 0.0
    %203 = vmatpush2.msra.mxu0 0.0
    %204 = vmatprep.subr.mxu0 0.0
    %205 = vmatpush2.msra.mxu0 0.0
    %206 = vmatprep.subr.mxu0 0.0
    %207 = vmatpush2.msra.mxu0 0.0
    %208 = vmatprep.subr.mxu0 0.0
    %209 = vmatpush2.msra.mxu0 0.0
    %210 = vmatprep.subr.mxu0 0.0
    %211 = vmatpush2.msra.mxu0 0.0
    %212 = vmatprep.subr.mxu0 0.0
    %213 = vmatpush2.msra.mxu0 0.0
    %214 = vmatprep.subr.mxu0 0.0
    %215 = vmatpush2.msra.mxu0 0.0
    %216 = vmatprep.subr.mxu0 0.0
    %217 = vmatpush2.msra.mxu0 0.0
    %218 = vmatprep.mubr.f32.mxu0 0.0
    %219 = vmatmul.mubr.f32.gmra.mxu0 %v134
    %v220 = vpop.f32.mrf.mxu0
    %v221 = vadd.f32 0.0, %v220
    %v222 = vpop.f32.mrf.mxu0
    %223 = vmatprep.mubr.f32.mxu0 0.0
    %224 = vmatmul.mubr.f32.gmra.mxu0 %v135
    %v225 = vpop.f32.mrf.mxu0
    %v226 = vadd.f32 0.0, %v225
    %v227 = vpop.f32.mrf.mxu0
    %228 = vdwg.mxu0
    %v229 = vadd.f32 %v152, %v221
    %v230 = vadd.f32 %v153, %v226
    %231 = vst.msk [vmem:[#allocation2] sm:$0xff] %vm21, %v229
    %232 = vst.msk [vmem:[#allocation2 + $0x8] sm:$0xff] %vm21, %v230
    %v233 = vld [vmem:[#allocation2] sm:$0xff]
    %v234 = vld [vmem:[#allocation2 + $0x8] sm:$0xff]
    %v235 = vld [vmem:[%s4] sm:$0x1]
    %v237 = vlaneseq
    %v238 = vshrl.u32 %v237, 7
    %v239 = vsub.s32 0, %v238
    %v240 = vrot.slane %v235, %v239
    %v242 = vadd.f32 %v233, %v240
    %v243 = vadd.f32 %v234, %v240
    %244 = vst.msk [vmem:[#allocation3] sm:$0xff] %vm21, %v242
    %245 = vst.msk [vmem:[#allocation3 + $0x8] sm:$0xff] %vm21, %v243
    // Predicated region
    $region22: #{tpu_custom_call.1} parent=1 // pred_check
      _
    $region23: #{tpu_custom_call.1} parent=1 // pred_check_branch
      %247 = sbr.rel (0) target = $region25
    $region24: #{tpu_custom_call.1} parent=1 // pred_region
      %s249 = ssub.s32 256, 256
      %250 = vsyncadd [#allocation4], %s249
      %s251 = sshll.u32 [#allocation3], 4
      %s252 = int_to_ptr.vmem [resolvable:$true] %s251
      %257 = dma.vmem_to_hbm [thread:$0]  %s252, 256, %s5, [#allocation4], 128, 128, 8
    $region25: #{tpu_custom_call.1} parent=1 // pred_fallthru
      _
    // Predicated region
    $region26: #{tpu_custom_call.1} parent=1 // pred_check
      _
    $region27: #{tpu_custom_call.1} parent=1 // pred_check_branch
      %259 = sbr.rel (0) target = $region29
    $region28: #{tpu_custom_call.1} parent=1 // pred_region
      %260 = dma.done [#allocation4], 256
    $region29: #{tpu_custom_call.1} parent=1 // pred_fallthru
      _
    %261 = vsyncpa [#allocation4], 1

// kernel: tpu_custom_call.1
$region0: #{tpu_custom_call.1}
  #allocation0 [shape = 'u32[]', space=smem, size = 0x4, offset = 0x4, fixed_abs, tag = 'smem constant byte address 0x4 - core index']
  #allocation1 [shape = 'u32[144,128]{1,0:T(1,128)}', space=vmem, size = 0x12000, scoped, tag = 'internal scratch']
  #allocation2 [shape = 'f32[16,32]{1,0:T(8,128)}', space=vmem, size = 0x2000, scoped, tag = 'scratch operand']
  %s0 = inlined_call_operand.vmem [shape: f32[16,32], index: 0, kind: input, shape index: {}]
  %s1 = inlined_call_operand.vmem [shape: f32[32,128], index: 1, kind: input, shape index: {}]
  %s2 = inlined_call_operand.vmem [shape: f32[1,128], index: 2, kind: input, shape index: {}]
  %s3 = inlined_call_operand.vmem [shape: f32[128,32], index: 3, kind: input, shape index: {}]
  %s4 = inlined_call_operand.vmem [shape: f32[1,32], index: 4, kind: input, shape index: {}]
  %s5 = inlined_call_operand.hbm [shape: f32[16,32], index: 5, kind: output, shape index: {}]
  %s6 = sld [smem:[#allocation0]]
  $region30: #{tpu_custom_call.1} parent=0
    _
  %s8 = ssub.s32 1, %s6
  %s9 = scalar_select 0, %s8, %s6
  $region1: #{tpu_custom_call.1} parent=0
    #allocation3 [shape = 'u8[8192]{0}', space=vmem, size = 0x2000, scoped, tag = 'output window, operand 0, single buffered']
    #allocation4 [shape = 's32[1]{0}', space=sflag, size = 0x4, scoped, tag = 'scoped memory for tpu_custom_call.1']
    %10 = vsyncpa [#allocation4], 0
    // Predicated region
    $region2: #{tpu_custom_call.1} parent=1 // pred_check
      _
    $region3: #{tpu_custom_call.1} parent=1 // pred_check_branch
      %12 = sbr.rel (0) target = $region5
    $region4: #{tpu_custom_call.1} parent=1 // pred_region
      _
    $region5: #{tpu_custom_call.1} parent=1 // pred_fallthru
      _
    // Predicated region
    $region6: #{tpu_custom_call.1} parent=1 // pred_check
      _
    $region7: #{tpu_custom_call.1} parent=1 // pred_check_branch
      %14 = sbr.rel (0) target = $region9
    $region8: #{tpu_custom_call.1} parent=1 // pred_region
      _
    $region9: #{tpu_custom_call.1} parent=1 // pred_fallthru
      _
    // Predicated region
    $region10: #{tpu_custom_call.1} parent=1 // pred_check
      _
    $region11: #{tpu_custom_call.1} parent=1 // pred_check_branch
      %16 = sbr.rel (0) target = $region13
    $region12: #{tpu_custom_call.1} parent=1 // pred_region
      _
    $region13: #{tpu_custom_call.1} parent=1 // pred_fallthru
      _
    // Predicated region
    $region14: #{tpu_custom_call.1} parent=1 // pred_check
      _
    $region15: #{tpu_custom_call.1} parent=1 // pred_check_branch
      %18 = sbr.rel (0) target = $region17
    $region16: #{tpu_custom_call.1} parent=1 // pred_region
      _
    $region17: #{tpu_custom_call.1} parent=1 // pred_fallthru
      _
    // Predicated region
    $region18: #{tpu_custom_call.1} parent=1 // pred_check
      _
    $region19: #{tpu_custom_call.1} parent=1 // pred_check_branch
      %20 = sbr.rel (0) target = $region21
    $region20: #{tpu_custom_call.1} parent=1 // pred_region
      _
    $region21: #{tpu_custom_call.1} parent=1 // pred_fallthru
      _
    %vm21 = vcmask 261120
    %22 = vst.msk [vmem:[#allocation2] sm:$0xff] %vm21, 0.0
    %23 = vst.msk [vmem:[#allocation2 + $0x8] sm:$0xff] %vm21, 0.0
    %v24 = vld [vmem:[%s1] sm:$0xff]
    %v25 = vld [vmem:[%s1 + $0x8] sm:$0xff]
    %v26 = vld [vmem:[%s1 + $0x10] sm:$0xff]
    %v27 = vld [vmem:[%s1 + $0x18] sm:$0xff]
    %v28 = vld [vmem:[%s0] sm:$0xff]
    %v29 = vld [vmem:[%s0 + $0x8] sm:$0xff]
    %v30 = vld [vmem:[%s2] sm:$0x1]
    %v32 = vlaneseq
    %v33 = vshrl.u32 %v32, 7
    %v34 = vsub.s32 0, %v33
    %v35 = vrot.slane %v30, %v34
    %v38 = vsel %vm21, %v28, 0
    %v41 = vsel %vm21, %v29, 0
    %43 = vmatprep.subr.mxu0 0.0
    %44 = vmatpush1.msra.mxu0 0.0
    %45 = vmatprep.subr.mxu0 0.0
    %46 = vmatpush1.msra.mxu0 0.0
    %47 = vmatprep.subr.mxu0 0.0
    %48 = vmatpush1.msra.mxu0 0.0
    %49 = vmatprep.subr.mxu0 0.0
    %50 = vmatpush1.msra.mxu0 0.0
    %51 = vmatprep.subr.mxu0 0.0
    %52 = vmatpush1.msra.mxu0 0.0
    %53 = vmatprep.subr.mxu0 0.0
    %54 = vmatpush1.msra.mxu0 0.0
    %55 = vmatprep.subr.mxu0 0.0
    %56 = vmatpush1.msra.mxu0 0.0
    %57 = vmatprep.subr.mxu0 0.0
    %58 = vmatpush1.msra.mxu0 0.0
    %59 = vmatprep.subr.mxu0 0.0
    %60 = vmatpush1.msra.mxu0 0.0
    %61 = vmatprep.subr.mxu0 0.0
    %62 = vmatpush1.msra.mxu0 0.0
    %63 = vmatprep.subr.mxu0 0.0
    %64 = vmatpush1.msra.mxu0 0.0
    %65 = vmatprep.subr.mxu0 0.0
    %66 = vmatpush1.msra.mxu0 0.0
    %67 = vmatprep.subr.mxu0 0.0
    %68 = vmatpush1.msra.mxu0 %v27
    %69 = vmatprep.subr.mxu0 0.0
    %70 = vmatpush1.msra.mxu0 %v26
    %71 = vmatprep.subr.mxu0 0.0
    %72 = vmatpush1.msra.mxu0 %v25
    %73 = vmatprep.subr.mxu0 0.0
    %74 = vmatpush1.msra.mxu0 %v24
    %75 = vmatprep.subr.mxu0 0.0
    %76 = vmatpush2.msra.mxu0 0.0
    %77 = vmatprep.subr.mxu0 0.0
    %78 = vmatpush2.msra.mxu0 0.0
    %79 = vmatprep.subr.mxu0 0.0
    %80 = vmatpush2.msra.mxu0 0.0
    %81 = vmatprep.subr.mxu0 0.0
    %82 = vmatpush2.msra.mxu0 0.0
    %83 = vmatprep.subr.mxu0 0.0
    %84 = vmatpush2.msra.mxu0 0.0
    %85 = vmatprep.subr.mxu0 0.0
    %86 = vmatpush2.msra.mxu0 0.0
    %87 = vmatprep.subr.mxu0 0.0
    %88 = vmatpush2.msra.mxu0 0.0
    %89 = vmatprep.subr.mxu0 0.0
    %90 = vmatpush2.msra.mxu0 0.0
    %91 = vmatprep.subr.mxu0 0.0
    %92 = vmatpush2.msra.mxu0 0.0
    %93 = vmatprep.subr.mxu0 0.0
    %94 = vmatpush2.msra.mxu0 0.0
    %95 = vmatprep.subr.mxu0 0.0
    %96 = vmatpush2.msra.mxu0 0.0
    %97 = vmatprep.subr.mxu0 0.0
    %98 = vmatpush2.msra.mxu0 0.0
    %99 = vmatprep.subr.mxu0 0.0
    %100 = vmatpush2.msra.mxu0 0.0
    %101 = vmatprep.subr.mxu0 0.0
    %102 = vmatpush2.msra.mxu0 0.0
    %103 = vmatprep.subr.mxu0 0.0
    %104 = vmatpush2.msra.mxu0 0.0
    %105 = vmatprep.subr.mxu0 0.0
    %106 = vmatpush2.msra.mxu0 0.0
    %107 = vmatprep.mubr.f32.mxu0 0.0
    %108 = vmatmul.mubr.f32.gmra.mxu0 %v38
    %v109 = vpop.f32.mrf.mxu0
    %v110 = vadd.f32 %v35, %v109
    %v111 = vpop.f32.mrf.mxu0
    %112 = vmatprep.mubr.f32.mxu0 0.0
    %113 = vmatmul.mubr.f32.gmra.mxu0 %v41
    %v114 = vpop.f32.mrf.mxu0
    %v115 = vadd.f32 %v35, %v114
    %v116 = vpop.f32.mrf.mxu0
    %117 = vdwg.mxu0
    %v118 = vmul.f32 %v110, 0.5
    %v119 = vmul.f32 %v115, 0.5
    %v120 = vmul.f32 %v110, 0.044715
    %v121 = vmul.f32 %v115, 0.044715
    %v122 = vmul.f32 %v120, %v110
    %v123 = vmul.f32 %v121, %v115
    %v124 = vmul.f32 %v122, %v110
    %v125 = vmul.f32 %v123, %v115
    %v126 = vadd.f32 %v110, %v124
    %v127 = vadd.f32 %v115, %v125
    %v128 = vmul.f32 %v126, 0.7978846
    %v129 = vmul.f32 %v127, 0.7978846
    %v130 = vtanh.pop %v128
    %v131 = vtanh.pop %v129
    %v132 = vadd.f32 %v130, 1.0
    %v133 = vadd.f32 %v131, 1.0
    %v134 = vmul.f32 %v118, %v132
    %v135 = vmul.f32 %v119, %v133
    %v136 = vld [vmem:[%s3] sm:$0xff]
    %v137 = vld [vmem:[%s3 + $0x8] sm:$0xff]
    %v138 = vld [vmem:[%s3 + $0x10] sm:$0xff]
    %v139 = vld [vmem:[%s3 + $0x18] sm:$0xff]
    %v140 = vld [vmem:[%s3 + $0x20] sm:$0xff]
    %v141 = vld [vmem:[%s3 + $0x28] sm:$0xff]
    %v142 = vld [vmem:[%s3 + $0x30] sm:$0xff]
    %v143 = vld [vmem:[%s3 + $0x38] sm:$0xff]
    %v144 = vld [vmem:[%s3 + $0x40] sm:$0xff]
    %v145 = vld [vmem:[%s3 + $0x48] sm:$0xff]
    %v146 = vld [vmem:[%s3 + $0x50] sm:$0xff]
    %v147 = vld [vmem:[%s3 + $0x58] sm:$0xff]
    %v148 = vld [vmem:[%s3 + $0x60] sm:$0xff]
    %v149 = vld [vmem:[%s3 + $0x68] sm:$0xff]
    %v150 = vld [vmem:[%s3 + $0x70] sm:$0xff]
    %v151 = vld [vmem:[%s3 + $0x78] sm:$0xff]
    %v152 = vld [vmem:[#allocation2] sm:$0xff]
    %v153 = vld [vmem:[#allocation2 + $0x8] sm:$0xff]
    %154 = vmatprep.subr.mxu0 0.0
    %155 = vmatpush1.msra.mxu0 %v151
    %156 = vmatprep.subr.mxu0 0.0
    %157 = vmatpush1.msra.mxu0 %v150
    %158 = vmatprep.subr.mxu0 0.0
    %159 = vmatpush1.msra.mxu0 %v149
    %160 = vmatprep.subr.mxu0 0.0
    %161 = vmatpush1.msra.mxu0 %v148
    %162 = vmatprep.subr.mxu0 0.0
    %163 = vmatpush1.msra.mxu0 %v147
    %164 = vmatprep.subr.mxu0 0.0
    %165 = vmatpush1.msra.mxu0 %v146
    %166 = vmatprep.subr.mxu0 0.0
    %167 = vmatpush1.msra.mxu0 %v145
    %168 = vmatprep.subr.mxu0 0.0
    %169 = vmatpush1.msra.mxu0 %v144
    %170 = vmatprep.subr.mxu0 0.0
    %171 = vmatpush1.msra.mxu0 %v143
    %172 = vmatprep.subr.mxu0 0.0
    %173 = vmatpush1.msra.mxu0 %v142
    %174 = vmatprep.subr.mxu0 0.0
    %175 = vmatpush1.msra.mxu0 %v141
    %176 = vmatprep.subr.mxu0 0.0
    %177 = vmatpush1.msra.mxu0 %v140
    %178 = vmatprep.subr.mxu0 0.0
    %179 = vmatpush1.msra.mxu0 %v139
    %180 = vmatprep.subr.mxu0 0.0
    %181 = vmatpush1.msra.mxu0 %v138
    %182 = vmatprep.subr.mxu0 0.0
    %183 = vmatpush1.msra.mxu0 %v137
    %184 = vmatprep.subr.mxu0 0.0
    %185 = vmatpush1.msra.mxu0 %v136
    %186 = vmatprep.subr.mxu0 0.0
    %187 = vmatpush2.msra.mxu0 0.0
    %188 = vmatprep.subr.mxu0 0.0
    %189 = vmatpush2.msra.mxu0 0.0
    %190 = vmatprep.subr.mxu0 0.0
    %191 = vmatpush2.msra.mxu0 0.0
    %192 = vmatprep.subr.mxu0 0.0
    %193 = vmatpush2.msra.mxu0 0.0
    %194 = vmatprep.subr.mxu0 0.0
    %195 = vmatpush2.msra.mxu0 0.0
    %196 = vmatprep.subr.mxu0 0.0
    %197 = vmatpush2.msra.mxu0 0.0
    %198 = vmatprep.subr.mxu0 0.0
    %199 = vmatpush2.msra.mxu0 0.0
    %200 = vmatprep.subr.mxu0 0.0
    %201 = vmatpush2.msra.mxu0 0.0
    %202 = vmatprep.subr.mxu0 0.0
    %203 = vmatpush2.msra.mxu0 0.0
    %204 = vmatprep.subr.mxu0 0.0
    %205 = vmatpush2.msra.mxu0 0.0
    %206 = vmatprep.subr.mxu0 0.0
    %207 = vmatpush2.msra.mxu0 0.0
    %208 = vmatprep.subr.mxu0 0.0
    %209 = vmatpush2.msra.mxu0 0.0
    %210 = vmatprep.subr.mxu0 0.0
    %211 = vmatpush2.msra.mxu0 0.0
    %212 = vmatprep.subr.mxu0 0.0
    %213 = vmatpush2.msra.mxu0 0.0
    %214 = vmatprep.subr.mxu0 0.0
    %215 = vmatpush2.msra.mxu0 0.0
    %216 = vmatprep.subr.mxu0 0.0
    %217 = vmatpush2.msra.mxu0 0.0
    %218 = vmatprep.mubr.f32.mxu0 0.0
    %219 = vmatmul.mubr.f32.gmra.mxu0 %v134
    %v220 = vpop.f32.mrf.mxu0
    %v221 = vadd.f32 0.0, %v220
    %v222 = vpop.f32.mrf.mxu0
    %223 = vmatprep.mubr.f32.mxu0 0.0
    %224 = vmatmul.mubr.f32.gmra.mxu0 %v135
    %v225 = vpop.f32.mrf.mxu0
    %v226 = vadd.f32 0.0, %v225
    %v227 = vpop.f32.mrf.mxu0
    %228 = vdwg.mxu0
    %v229 = vadd.f32 %v152, %v221
    %v230 = vadd.f32 %v153, %v226
    %231 = vst.msk [vmem:[#allocation2] sm:$0xff] %vm21, %v229
    %232 = vst.msk [vmem:[#allocation2 + $0x8] sm:$0xff] %vm21, %v230
    %v233 = vld [vmem:[#allocation2] sm:$0xff]
    %v234 = vld [vmem:[#allocation2 + $0x8] sm:$0xff]
    %v235 = vld [vmem:[%s4] sm:$0x1]
    %v237 = vlaneseq
    %v238 = vshrl.u32 %v237, 7
    %v239 = vsub.s32 0, %v238
    %v240 = vrot.slane %v235, %v239
    %v242 = vadd.f32 %v233, %v240
    %v243 = vadd.f32 %v234, %v240
    %244 = vst.msk [vmem:[#allocation3] sm:$0xff] %vm21, %v242
    %245 = vst.msk [vmem:[#allocation3 + $0x8] sm:$0xff] %vm21, %v243
    // Predicated region
    $region22: #{tpu_custom_call.1} parent=1 // pred_check
      _
    $region23: #{tpu_custom_call.1} parent=1 // pred_check_branch
      %247 = sbr.rel (0) target = $region25
    $region24: #{tpu_custom_call.1} parent=1 // pred_region
      %s249 = ssub.s32 256, 256
      %250 = vsyncadd [#allocation4], %s249
      %s251 = sshll.u32 [#allocation3], 4
      %s252 = int_to_ptr.vmem [resolvable:$true] %s251
      %257 = dma.vmem_to_hbm [thread:$0]  %s252, 256, %s5, [#allocation4], 128, 128, 8
    $region25: #{tpu_custom_call.1} parent=1 // pred_fallthru
      _
    // Predicated region
    $region26: #{tpu_custom_call.1} parent=1 // pred_check
      _
    $region27: #{tpu_custom_call.1} parent=1 // pred_check_branch
      %259 = sbr.rel (0) target = $region29
    $region28: #{tpu_custom_call.1} parent=1 // pred_region
      %260 = dma.done [#allocation4], 256
    $region29: #{tpu_custom_call.1} parent=1 // pred_fallthru
      _
    %261 = vsyncpa [#allocation4], 1

</llo_original>
